<compile_context>
chip_gen: v6e
topology: v6e:2x2x1
jax: 0.10.0
libtpu: 0.0.40
codegen_flags: <defaults>
</compile_context>

<pallas_src>
import jax
import jax.numpy as jnp
import numpy as np
from jax import lax
from jax.experimental import pallas as pl
from jax.experimental.pallas import tpu as pltpu


def _round_up(x, m):
    return (x + m - 1) // m * m


def _vmem_limit(footprint_bytes):
    """Generation-aware VMEM request: 2x footprint, capped well below capacity."""
    try:
        cap = int(pltpu.get_tpu_info().vmem_capacity_bytes)
    except Exception:  # conservative fallback = v7x per-core VMEM
        cap = 64 * 1024 * 1024
    ceiling = (cap * 3) // 4                      # leave pipeline headroom
    want = max(8 * 1024 * 1024, 2 * int(footprint_bytes))
    return int(min(ceiling, want))


# --------------------------------------------------------------------------- #
# Pass 1: M_v[node_block] += one_hot(dest) @ relu(E_tile)   (scatter-sum)
# grid = (node_blocks [parallel], edge_tiles [arbitrary])
# --------------------------------------------------------------------------- #
def _scatter_kernel(dest_ref, e_ref, mv_ref):
    h = jnp.maximum(e_ref[...], 0.0)                       # relu(E) tile
    node_tile = mv_ref.shape[0]
    edge_tile = e_ref.shape[0]
    base = pl.program_id(0) * node_tile
    # sel[n, e] = 1.0 iff dest[e] == base + n  (padded edges carry dest == -1)
    node_iota = base + lax.broadcasted_iota(jnp.int32, (node_tile, edge_tile), 0)
    sel = (node_iota == dest_ref[...]).astype(jnp.float32)

    @pl.when(pl.program_id(1) == 0)
    def _():
        mv_ref[...] = jnp.zeros_like(mv_ref)

    mv_ref[...] += jnp.dot(sel, h, preferred_element_type=jnp.float32)


# --------------------------------------------------------------------------- #
# Pass 2: out = (M_v[src] - relu(E[rev])) @ W.T + b   (gathers done in wrapper)
# grid = (edge_tiles [parallel])
# --------------------------------------------------------------------------- #
def _update_kernel(msrc_ref, erev_ref, wt_ref, b_ref, out_ref):
    m = msrc_ref[...] - jnp.maximum(erev_ref[...], 0.0)
    out_ref[...] = (
        jnp.dot(m, wt_ref[...], preferred_element_type=jnp.float32) + b_ref[...]
    )


# --------------------------------------------------------------------------- #
# Fused single-invocation kernel for small graphs (everything resident in VMEM)
# --------------------------------------------------------------------------- #
def _make_fused_kernel(n_pad):
    def kernel(dest_ref, src_ref, e_ref, erev_ref, wt_ref, b_ref, out_ref):
        h = jnp.maximum(e_ref[...], 0.0)                   # (e_pad, h_pad)
        e_pad = h.shape[0]
        # scatter-sum into nodes via one-hot selector on the MXU
        scat_iota = lax.broadcasted_iota(jnp.int32, (n_pad, e_pad), 0)
        sel_scat = (scat_iota == dest_ref[...]).astype(jnp.float32)
        mv = jnp.dot(sel_scat, h, preferred_element_type=jnp.float32)
        # gather M_v[src] via one-hot selector (small n_pad only)
        gat_iota = lax.broadcasted_iota(jnp.int32, (e_pad, n_pad), 1)
        sel_gat = (gat_iota == src_ref[...]).astype(jnp.float32)
        m = jnp.dot(sel_gat, mv, preferred_element_type=jnp.float32)
        m = m - jnp.maximum(erev_ref[...], 0.0)            # - relu(E[rev])
        out_ref[...] = (
            jnp.dot(m, wt_ref[...], preferred_element_type=jnp.float32) + b_ref[...]
        )
    return kernel


def chemprop_layer(E, edge_index, rev_index, num_nodes, W, b, *,
                   edge_tile=None, node_tile=None, use_fused=None):
    """Pallas implementation of ChempropLayer.forward (returns new edge states)."""
    # TODO(synk): only reduce='sum' and dropout p=0.0 (identity) are implemented.
    f32 = jnp.float32
    src = edge_index[0].astype(jnp.int32)
    dest = edge_index[1].astype(jnp.int32)
    rev = rev_index.astype(jnp.int32)
    num_edges, hidden = E.shape

    h_pad = _round_up(hidden, 128)                  # lane-dense hidden
    e8 = _round_up(max(num_edges, 8), 8)            # sublane-aligned edges
    n8 = _round_up(max(num_nodes, 8), 8)            # sublane-aligned nodes
    fsz = 4

    # padded weight / bias shared by both paths
    Wt_p = jnp.zeros((h_pad, h_pad), f32).at[:hidden, :hidden].set(W.T.astype(f32))
    b_p = jnp.zeros((1, h_pad), f32).at[0, :hidden].set(b.astype(f32))

    fused_fp = fsz * (4 * e8 * h_pad + 2 * n8 * h_pad + h_pad * h_pad
                      + 2 * e8 * n8 + 4 * e8)
    if use_fused is None:
        use_fused = (edge_tile is None and node_tile is None
                     and e8 <= 2048 and n8 <= 2048
                     and fused_fp <= 4 * 1024 * 1024)

    # ---------------- fused path: one pallas_call, no grid, no HBM staging ----
    if use_fused:
        e_pad, n_pad = e8, n8
        E_p = jnp.zeros((e_pad, h_pad), f32).at[:num_edges, :hidden].set(E.astype(f32))
        dest_row = jnp.full((1, e_pad), -1, jnp.int32).at[0, :num_edges].set(dest)
        src_col = jnp.full((e_pad, 1), -1, jnp.int32).at[:num_edges, 0].set(src)
        rev_pad = jnp.zeros((e_pad,), jnp.int32).at[:num_edges].set(rev)
        E_rev_p = jnp.take(E_p, rev_pad, axis=0)    # relu recomputed in-kernel

        flops = (4 * n_pad * e_pad * h_pad          # scatter + src gather
                 + 2 * e_pad * h_pad * h_pad        # Linear
                 + 2 * e_pad * h_pad)
        bytes_acc = fsz * (3 * e_pad * h_pad + h_pad * h_pad + h_pad + 2 * e_pad)

        out_p = pl.pallas_call(
            _make_fused_kernel(n_pad),
            out_shape=jax.ShapeDtypeStruct((e_pad, h_pad), f32),
            compiler_params=pltpu.CompilerParams(
                vmem_limit_bytes=_vmem_limit(fused_fp)),
            cost_estimate=pl.CostEstimate(flops=int(flops), transcendentals=0,
                                          bytes_accessed=int(bytes_acc)),
        )(dest_row, src_col, E_p, E_rev_p, Wt_p, b_p)
        return out_p[:num_edges, :hidden]

    # ---------------- two-pass tiled path -------------------------------------
    if edge_tile is None:
        edge_tile = 512
    edge_tile = _round_up(min(edge_tile, e8), 8)
    if edge_tile < e8:
        edge_tile = _round_up(edge_tile, 128)       # lane-aligned dest-row blocks
    e_pad = _round_up(e8, edge_tile)
    n_edge_tiles = e_pad // edge_tile

    if node_tile is None:
        node_tile = min(n8, 512)
    node_tile = _round_up(min(node_tile, n8), 8)
    n_pad = _round_up(n8, node_tile)
    n_node_blocks = n_pad // node_tile

    E_p = jnp.zeros((e_pad, h_pad), f32).at[:num_edges, :hidden].set(E.astype(f32))
    dest_row = jnp.full((1, e_pad), -1, jnp.int32).at[0, :num_edges].set(dest)

    # ---- pass 1: M_v = scatter_sum(relu(E), dest) ----------------------------
    fp1 = 2 * fsz * (edge_tile * h_pad + edge_tile + node_tile * h_pad)
    bytes1 = fsz * (n_node_blocks * (e_pad * h_pad + e_pad) + n_pad * h_pad)
    flops1 = 2 * n_pad * e_pad * h_pad + n_node_blocks * e_pad * h_pad

    mv = pl.pallas_call(
        _scatter_kernel,
        out_shape=jax.ShapeDtypeStruct((n_pad, h_pad), f32),
        grid=(n_node_blocks, n_edge_tiles),
        in_specs=[
            pl.BlockSpec((1, edge_tile), lambda nb, e: (0, e)),       # dest tile
            pl.BlockSpec((edge_tile, h_pad), lambda nb, e: (e, 0)),   # E tile
        ],
        out_specs=pl.BlockSpec((node_tile, h_pad), lambda nb, e: (nb, 0)),
        compiler_params=pltpu.CompilerParams(
            dimension_semantics=("parallel", "arbitrary"),  # node blocks disjoint
            vmem_limit_bytes=_vmem_limit(fp1)),
        cost_estimate=pl.CostEstimate(flops=int(flops1), transcendentals=0,
                                      bytes_accessed=int(bytes1)),
    )(dest_row, E_p)

    # gathers stay on XLA -> pass 2 only pays MXU time for the real Linear
    src_pad = jnp.zeros((e_pad,), jnp.int32).at[:num_edges].set(src)
    rev_pad = jnp.zeros((e_pad,), jnp.int32).at[:num_edges].set(rev)
    mv_src = jnp.take(mv, src_pad, axis=0)          # (e_pad, h_pad)
    e_rev = jnp.take(E_p, rev_pad, axis=0)          # (e_pad, h_pad), relu in-kernel

    # ---- pass 2: out = (M_v[src] - relu(E[rev])) @ W.T + b -------------------
    fp2 = 2 * fsz * (3 * edge_tile * h_pad + h_pad * h_pad + h_pad)
    bytes2 = fsz * (3 * e_pad * h_pad + h_pad * h_pad + h_pad)
    flops2 = 2 * e_pad * h_pad * h_pad + 2 * e_pad * h_pad

    out_p = pl.pallas_call(
        _update_kernel,
        out_shape=jax.ShapeDtypeStruct((e_pad, h_pad), f32),
        grid=(n_edge_tiles,),
        in_specs=[
            pl.BlockSpec((edge_tile, h_pad), lambda t: (t, 0)),   # M_v[src] tile
            pl.BlockSpec((edge_tile, h_pad), lambda t: (t, 0)),   # E[rev]  tile
            pl.BlockSpec((h_pad, h_pad), lambda t: (0, 0)),       # W.T (const)
            pl.BlockSpec((1, h_pad), lambda t: (0, 0)),           # bias (const)
        ],
        out_specs=pl.BlockSpec((edge_tile, h_pad), lambda t: (t, 0)),
        compiler_params=pltpu.CompilerParams(
            dimension_semantics=("parallel",),     # edge tiles independent
            vmem_limit_bytes=_vmem_limit(fp2)),
        cost_estimate=pl.CostEstimate(flops=int(flops2), transcendentals=0,
                                      bytes_accessed=int(bytes2)),
    )(mv_src, e_rev, Wt_p, b_p)

    return out_p[:num_edges, :hidden]


if __name__ == "__main__":
    key = jax.random.PRNGKey(0)

    def make_ring_graph(num_nodes, hidden_dim, k):
        # Directed edge 2i = (u,v), 2i+1 = (v,u); rev_index swaps the pair.
        num_und = num_nodes
        num_edges = 2 * num_und
        u = np.arange(num_und) % num_nodes
        v = (np.arange(num_und) + 1) % num_nodes
        s = np.empty(num_edges, np.int32)
        d = np.empty(num_edges, np.int32)
        s[0::2], d[0::2] = u, v
        s[1::2], d[1::2] = v, u
        r = np.empty(num_edges, np.int32)
        r[0::2] = np.arange(1, num_edges, 2)
        r[1::2] = np.arange(0, num_edges, 2)
        edge_index = jnp.asarray(np.stack([s, d], axis=0), dtype=jnp.int32)
        rev_index = jnp.asarray(r, dtype=jnp.int32)
        k_e, k_w, k_b = jax.random.split(k, 3)
        E = jax.random.normal(k_e, (num_edges, hidden_dim), dtype=jnp.float32)
        W = jax.random.normal(k_w, (hidden_dim, hidden_dim), dtype=jnp.float32) * 0.1
        b = jax.random.normal(k_b, (hidden_dim,), dtype=jnp.float32) * 0.1
        return E, edge_index, rev_index, W, b

    def reference(E, edge_index, rev_index, num_nodes, W, b):
        H = jax.nn.relu(E)
        Mv = jnp.zeros((num_nodes, E.shape[1]), jnp.float32).at[edge_index[1]].add(H)
        M = Mv[edge_index[0]] - H[rev_index]
        return M @ W.T + b

    k1, k2 = jax.random.split(key)
    hidden_dim = 32

    # 1) tiny graph (8 nodes, 16 directed edges) -> fused single-call path
    n1 = 8
    E1, ei1, ri1, W1, b1 = make_ring_graph(n1, hidden_dim, k1)
    out1 = jax.block_until_ready(chemprop_layer(E1, ei1, ri1, n1, W1, b1))
    ref1 = reference(E1, ei1, ri1, n1, W1, b1)
    np.testing.assert_allclose(np.asarray(out1), np.asarray(ref1), rtol=1e-5, atol=1e-5)

    # 2) larger graph (96 nodes, 192 edges) -> two-pass tiled path
    #    (2 edge tiles x 3 node blocks exercises the accumulation grid)
    n2 = 96
    E2, ei2, ri2, W2, b2 = make_ring_graph(n2, hidden_dim, k2)
    out2 = jax.block_until_ready(
        chemprop_layer(E2, ei2, ri2, n2, W2, b2,
                       use_fused=False, edge_tile=128, node_tile=32))
    ref2 = reference(E2, ei2, ri2, n2, W2, b2)
    np.testing.assert_allclose(np.asarray(out2), np.asarray(ref2), rtol=1e-5, atol=1e-5)

    print("KERNEL_OK")
</pallas_src>

<mosaic_0001>
module attributes {stable_mosaic.version = 11 : i64} {
  func.func @kernel(%arg0: memref<1x16xi32, #tpu.memory_space<vmem>>, %arg1: memref<16x1xi32, #tpu.memory_space<vmem>>, %arg2: memref<16x128xf32, #tpu.memory_space<vmem>>, %arg3: memref<16x128xf32, #tpu.memory_space<vmem>>, %arg4: memref<128x128xf32, #tpu.memory_space<vmem>>, %arg5: memref<1x128xf32, #tpu.memory_space<vmem>>, %arg6: memref<16x128xf32, #tpu.memory_space<vmem>>) attributes {dimension_semantics = [], scalar_prefetch = 0 : i64, scratch_operands = 0 : i64, tpu.core_type = #tpu.core_type<tc>} {
    %c0 = arith.constant 0 : index
    %c0_0 = arith.constant 0 : index
    %0 = vector.load %arg2[%c0, %c0_0] : memref<16x128xf32, #tpu.memory_space<vmem>>, vector<16x128xf32>
    %cst = arith.constant 0.000000e+00 : f32
    %1 = vector.broadcast %cst : f32 to vector<16x128xf32>
    %2 = arith.maximumf %0, %1 : vector<16x128xf32>
    %3 = tpu.iota {dimensions = array<i32: 0>} : vector<8x16xi32>
    %c0_1 = arith.constant 0 : index
    %c0_2 = arith.constant 0 : index
    %4 = vector.load %arg0[%c0_1, %c0_2] : memref<1x16xi32, #tpu.memory_space<vmem>>, vector<1x16xi32>
    %5 = vector.broadcast %4 : vector<1x16xi32> to vector<8x16xi32>
    %6 = arith.cmpi eq, %3, %5 : vector<8x16xi32>
    %7 = arith.extui %6 : vector<8x16xi1> to vector<8x16xi32>
    %8 = arith.sitofp %7 : vector<8x16xi32> to vector<8x16xf32>
    %cst_3 = arith.constant dense<0.000000e+00> : vector<8x128xf32>
    %9 = tpu.matmul %8, %2, %cst_3 {dimension_numbers = #tpu.dot_dimension_numbers<[1], [0], [0], [1], [0, 0, 1, 1], [], []>} : vector<8x16xf32>, vector<16x128xf32>, vector<8x128xf32> -> vector<8x128xf32>
    %10 = tpu.iota {dimensions = array<i32: 1>} : vector<16x8xi32>
    %c0_4 = arith.constant 0 : index
    %c0_5 = arith.constant 0 : index
    %11 = vector.load %arg1[%c0_4, %c0_5] : memref<16x1xi32, #tpu.memory_space<vmem>>, vector<16x1xi32>
    %12 = vector.broadcast %11 : vector<16x1xi32> to vector<16x8xi32>
    %13 = arith.cmpi eq, %10, %12 : vector<16x8xi32>
    %14 = arith.extui %13 : vector<16x8xi1> to vector<16x8xi32>
    %15 = arith.sitofp %14 : vector<16x8xi32> to vector<16x8xf32>
    %cst_6 = arith.constant dense<0.000000e+00> : vector<16x128xf32>
    %16 = tpu.matmul %15, %9, %cst_6 {dimension_numbers = #tpu.dot_dimension_numbers<[1], [0], [0], [1], [0, 0, 1, 1], [], []>} : vector<16x8xf32>, vector<8x128xf32>, vector<16x128xf32> -> vector<16x128xf32>
    %c0_7 = arith.constant 0 : index
    %c0_8 = arith.constant 0 : index
    %17 = vector.load %arg3[%c0_7, %c0_8] : memref<16x128xf32, #tpu.memory_space<vmem>>, vector<16x128xf32>
    %cst_9 = arith.constant 0.000000e+00 : f32
    %18 = vector.broadcast %cst_9 : f32 to vector<16x128xf32>
    %19 = arith.maximumf %17, %18 : vector<16x128xf32>
    %20 = arith.subf %16, %19 : vector<16x128xf32>
    %c0_10 = arith.constant 0 : index
    %c0_11 = arith.constant 0 : index
    %21 = vector.load %arg4[%c0_10, %c0_11] : memref<128x128xf32, #tpu.memory_space<vmem>>, vector<128x128xf32>
    %cst_12 = arith.constant dense<0.000000e+00> : vector<16x128xf32>
    %22 = tpu.matmul %20, %21, %cst_12 {dimension_numbers = #tpu.dot_dimension_numbers<[1], [0], [0], [1], [0, 0, 1, 1], [], []>} : vector<16x128xf32>, vector<128x128xf32>, vector<16x128xf32> -> vector<16x128xf32>
    %c0_13 = arith.constant 0 : index
    %c0_14 = arith.constant 0 : index
    %23 = vector.load %arg5[%c0_13, %c0_14] : memref<1x128xf32, #tpu.memory_space<vmem>>, vector<1x128xf32>
    %24 = vector.broadcast %23 : vector<1x128xf32> to vector<16x128xf32>
    %25 = arith.addf %22, %24 : vector<16x128xf32>
    %c0_15 = arith.constant 0 : index
    %c0_16 = arith.constant 0 : index
    %26 = vector.load %arg6[%c0_15, %c0_16] : memref<16x128xf32, #tpu.memory_space<vmem>>, vector<16x128xf32>
    tpu.vector_store %arg6[%c0_15, %c0_16], %25 {strides = array<i32>} : memref<16x128xf32, #tpu.memory_space<vmem>>, vector<16x128xf32>,
    return
  }
}

</mosaic_0001>

<llo_original>
// kernel: tpu_custom_call.1
$region0: #{tpu_custom_call.1}
  #allocation0 [shape = 'u32[]', space=smem, size = 0x4, offset = 0x4, fixed_abs, tag = 'smem constant byte address 0x4 - core index']
  #allocation1 [shape = 'u32[144,128]{1,0:T(1,128)}', space=vmem, size = 0x12000, scoped, tag = 'internal scratch']
  %s0 = inlined_call_operand.vmem [shape: s32[1,16], index: 0, kind: input, shape index: {}]
  %s1 = inlined_call_operand.vmem [shape: s32[16,1], index: 1, kind: input, shape index: {}]
  %s2 = inlined_call_operand.vmem [shape: f32[16,128], index: 2, kind: input, shape index: {}]
  %s3 = inlined_call_operand.hbm [shape: f32[16,128], index: 3, kind: input, shape index: {}]
  %s4 = inlined_call_operand.hbm [shape: f32[128,128], index: 4, kind: input, shape index: {}]
  %s5 = inlined_call_operand.vmem [shape: f32[1,128], index: 5, kind: input, shape index: {}]
  %s6 = inlined_call_operand.hbm [shape: f32[16,128], index: 6, kind: output, shape index: {}]
  %s7 = sld [smem:[#allocation0]]
  $region42: #{tpu_custom_call.1} parent=0
    _
  %s9 = ssub.s32 1, %s7
  %s10 = scalar_select 0, %s9, %s7
  $region1: #{tpu_custom_call.1} parent=0
    #allocation2 [shape = 'u8[8192]{0}', space=vmem, size = 0x2000, scoped, tag = 'input window, operand 3, single buffered']
    #allocation3 [shape = 's32[1]{0}', space=sflag, size = 0x4, scoped, tag = 'scoped memory for tpu_custom_call.1']
    #allocation4 [shape = 's32[1]{0}', space=sflag, size = 0x4, scoped, tag = 'scoped memory for tpu_custom_call.1']
    #allocation5 [shape = 'u8[65536]{0}', space=vmem, size = 0x10000, scoped, tag = 'input window, operand 4, single buffered']
    #allocation6 [shape = 's32[1]{0}', space=sflag, size = 0x4, scoped, tag = 'scoped memory for tpu_custom_call.1']
    #allocation7 [shape = 'u8[8192]{0}', space=vmem, size = 0x2000, scoped, tag = 'output window, operand 0, single buffered']
    %11 = vsyncpa [#allocation3], 0
    %12 = vsyncpa [#allocation6], 0
    %13 = vsyncpa [#allocation4], 0
    // Predicated region
    $region2: #{tpu_custom_call.1} parent=1 // pred_check
      _
    $region3: #{tpu_custom_call.1} parent=1 // pred_check_branch
      %15 = sbr.rel (0) target = $region5
    $region4: #{tpu_custom_call.1} parent=1 // pred_region
      _
    $region5: #{tpu_custom_call.1} parent=1 // pred_fallthru
      _
    // Predicated region
    $region6: #{tpu_custom_call.1} parent=1 // pred_check
      _
    $region7: #{tpu_custom_call.1} parent=1 // pred_check_branch
      %17 = sbr.rel (0) target = $region9
    $region8: #{tpu_custom_call.1} parent=1 // pred_region
      _
    $region9: #{tpu_custom_call.1} parent=1 // pred_fallthru
      _
    // Predicated region
    $region10: #{tpu_custom_call.1} parent=1 // pred_check
      _
    $region11: #{tpu_custom_call.1} parent=1 // pred_check_branch
      %19 = sbr.rel (0) target = $region13
    $region12: #{tpu_custom_call.1} parent=1 // pred_region
      _
    $region13: #{tpu_custom_call.1} parent=1 // pred_fallthru
      _
    // Predicated region
    $region14: #{tpu_custom_call.1} parent=1 // pred_check
      _
    $region15: #{tpu_custom_call.1} parent=1 // pred_check_branch
      %21 = sbr.rel (0) target = $region17
    $region16: #{tpu_custom_call.1} parent=1 // pred_region
      %s23 = ssub.s32 256, 256
      %24 = vsyncadd [#allocation3], %s23
      %s25 = sshll.u32 [#allocation2], 4
      %s26 = int_to_ptr.vmem [resolvable:$true] %s25
      %31 = dma.hbm_to_vmem [thread:$0]  %s3, 256, %s26, [#allocation3], 128, 128, 8
    $region17: #{tpu_custom_call.1} parent=1 // pred_fallthru
      _
    // Predicated region
    $region18: #{tpu_custom_call.1} parent=1 // pred_check
      _
    $region19: #{tpu_custom_call.1} parent=1 // pred_check_branch
      %33 = sbr.rel (0) target = $region21
    $region20: #{tpu_custom_call.1} parent=1 // pred_region
      %s35 = ssub.s32 2048, 2048
      %36 = vsyncadd [#allocation6], %s35
      %s37 = sshll.u32 [#allocation5], 4
      %s38 = int_to_ptr.vmem [resolvable:$true] %s37
      %43 = dma.hbm_to_vmem [thread:$0]  %s4, 2048, %s38, [#allocation6], 128, 128, 8
    $region21: #{tpu_custom_call.1} parent=1 // pred_fallthru
      _
    // Predicated region
    $region22: #{tpu_custom_call.1} parent=1 // pred_check
      _
    $region23: #{tpu_custom_call.1} parent=1 // pred_check_branch
      %45 = sbr.rel (0) target = $region25
    $region24: #{tpu_custom_call.1} parent=1 // pred_region
      _
    $region25: #{tpu_custom_call.1} parent=1 // pred_fallthru
      _
    // Predicated region
    $region26: #{tpu_custom_call.1} parent=1 // pred_check
      _
    $region27: #{tpu_custom_call.1} parent=1 // pred_check_branch
      %47 = sbr.rel (0) target = $region29
    $region28: #{tpu_custom_call.1} parent=1 // pred_region
      %48 = dma.done [#allocation3], 256
    $region29: #{tpu_custom_call.1} parent=1 // pred_fallthru
      _
    // Predicated region
    $region30: #{tpu_custom_call.1} parent=1 // pred_check
      _
    $region31: #{tpu_custom_call.1} parent=1 // pred_check_branch
      %50 = sbr.rel (0) target = $region33
    $region32: #{tpu_custom_call.1} parent=1 // pred_region
      %51 = dma.done [#allocation6], 2048
    $region33: #{tpu_custom_call.1} parent=1 // pred_fallthru
      _
    %v52 = vld [vmem:[%s2] sm:$0xff]
    %v53 = vld [vmem:[%s2 + $0x8] sm:$0xff]
    %v54 = vmax.f32 %v52, 0.0
    %v55 = vmax.f32 %v53, 0.0
    %v56 = vlaneseq
    %v57 = vshrl.u32 %v56, 7
    %v58 = vld [vmem:[%s0] sm:$0x1]
    %v59 = vlaneseq
    %v60 = vshrl.u32 %v59, 7
    %v61 = vsub.s32 0, %v60
    %v62 = vrot.slane %v58, %v61
    %vm63 = vcmp.eq.s32.totalorder %v57, %v62
    %v64 = vsel %vm63, 1, 0
    %v65 = vcvt.s32.f32 %v64
    %vm66 = vcmask 130048
    %v68 = vsel %vm66, %v65, 0
    %70 = vmatprep.subr.mxu0 0.0
    %71 = vmatpush1.msra.mxu0 0.0
    %72 = vmatprep.subr.mxu0 0.0
    %73 = vmatpush1.msra.mxu0 0.0
    %74 = vmatprep.subr.mxu0 0.0
    %75 = vmatpush1.msra.mxu0 0.0
    %76 = vmatprep.subr.mxu0 0.0
    %77 = vmatpush1.msra.mxu0 0.0
    %78 = vmatprep.subr.mxu0 0.0
    %79 = vmatpush1.msra.mxu0 0.0
    %80 = vmatprep.subr.mxu0 0.0
    %81 = vmatpush1.msra.mxu0 0.0
    %82 = vmatprep.subr.mxu0 0.0
    %83 = vmatpush1.msra.mxu0 0.0
    %84 = vmatprep.subr.mxu0 0.0
    %85 = vmatpush1.msra.mxu0 0.0
    %86 = vmatprep.subr.mxu0 0.0
    %87 = vmatpush1.msra.mxu0 0.0
    %88 = vmatprep.subr.mxu0 0.0
    %89 = vmatpush1.msra.mxu0 0.0
    %90 = vmatprep.subr.mxu0 0.0
    %91 = vmatpush1.msra.mxu0 0.0
    %92 = vmatprep.subr.mxu0 0.0
    %93 = vmatpush1.msra.mxu0 0.0
    %94 = vmatprep.subr.mxu0 0.0
    %95 = vmatpush1.msra.mxu0 0.0
    %96 = vmatprep.subr.mxu0 0.0
    %97 = vmatpush1.msra.mxu0 0.0
    %98 = vmatprep.subr.mxu0 0.0
    %99 = vmatpush1.msra.mxu0 %v55
    %100 = vmatprep.subr.mxu0 0.0
    %101 = vmatpush1.msra.mxu0 %v54
    %102 = vmatprep.subr.mxu0 0.0
    %103 = vmatpush2.msra.mxu0 0.0
    %104 = vmatprep.subr.mxu0 0.0
    %105 = vmatpush2.msra.mxu0 0.0
    %106 = vmatprep.subr.mxu0 0.0
    %107 = vmatpush2.msra.mxu0 0.0
    %108 = vmatprep.subr.mxu0 0.0
    %109 = vmatpush2.msra.mxu0 0.0
    %110 = vmatprep.subr.mxu0 0.0
    %111 = vmatpush2.msra.mxu0 0.0
    %112 = vmatprep.subr.mxu0 0.0
    %113 = vmatpush2.msra.mxu0 0.0
    %114 = vmatprep.subr.mxu0 0.0
    %115 = vmatpush2.msra.mxu0 0.0
    %116 = vmatprep.subr.mxu0 0.0
    %117 = vmatpush2.msra.mxu0 0.0
    %118 = vmatprep.subr.mxu0 0.0
    %119 = vmatpush2.msra.mxu0 0.0
    %120 = vmatprep.subr.mxu0 0.0
    %121 = vmatpush2.msra.mxu0 0.0
    %122 = vmatprep.subr.mxu0 0.0
    %123 = vmatpush2.msra.mxu0 0.0
    %124 = vmatprep.subr.mxu0 0.0
    %125 = vmatpush2.msra.mxu0 0.0
    %126 = vmatprep.subr.mxu0 0.0
    %127 = vmatpush2.msra.mxu0 0.0
    %128 = vmatprep.subr.mxu0 0.0
    %129 = vmatpush2.msra.mxu0 0.0
    %130 = vmatprep.subr.mxu0 0.0
    %131 = vmatpush2.msra.mxu0 0.0
    %132 = vmatprep.subr.mxu0 0.0
    %133 = vmatpush2.msra.mxu0 0.0
    %134 = vmatprep.mubr.f32.mxu0 0.0
    %135 = vmatmul.mubr.f32.gmra.mxu0 %v68
    %v136 = vpop.f32.mrf.mxu0
    %v137 = vadd.f32 0.0, %v136
    %v138 = vpop.f32.mrf.mxu0
    %139 = vdwg.mxu0
    %v140 = vlaneseq
    %v141 = vand.u32 %v140, 127
    %v142 = vld [vmem:[%s1] sm:$0xff]
    %v143 = vld [vmem:[%s1 + $0x8] sm:$0xff]
    %144 = vset.pattern.permute.xlu0 0
    %145 = vperm.xlu0 %144, %v142
    %v146 = vpop.permute.xlu0 %145
    %147 = vset.pattern.permute.xlu0 0
    %148 = vperm.xlu0 %147, %v143
    %v149 = vpop.permute.xlu0 %148
    %vm150 = vcmp.eq.s32.totalorder %v141, %v146
    %vm151 = vcmp.eq.s32.totalorder %v141, %v149
    %v152 = vsel %vm150, 1, 0
    %v153 = vsel %vm151, 1, 0
    %v154 = vcvt.s32.f32 %v152
    %v155 = vcvt.s32.f32 %v153
    %vm156 = vcmask 64512
    %v158 = vsel %vm156, %v154, 0
    %v161 = vsel %vm156, %v155, 0
    %163 = vmatprep.subr.mxu0 0.0
    %164 = vmatpush1.msra.mxu0 0.0
    %165 = vmatprep.subr.mxu0 0.0
    %166 = vmatpush1.msra.mxu0 0.0
    %167 = vmatprep.subr.mxu0 0.0
    %168 = vmatpush1.msra.mxu0 0.0
    %169 = vmatprep.subr.mxu0 0.0
    %170 = vmatpush1.msra.mxu0 0.0
    %171 = vmatprep.subr.mxu0 0.0
    %172 = vmatpush1.msra.mxu0 0.0
    %173 = vmatprep.subr.mxu0 0.0
    %174 = vmatpush1.msra.mxu0 0.0
    %175 = vmatprep.subr.mxu0 0.0
    %176 = vmatpush1.msra.mxu0 0.0
    %177 = vmatprep.subr.mxu0 0.0
    %178 = vmatpush1.msra.mxu0 0.0
    %179 = vmatprep.subr.mxu0 0.0
    %180 = vmatpush1.msra.mxu0 0.0
    %181 = vmatprep.subr.mxu0 0.0
    %182 = vmatpush1.msra.mxu0 0.0
    %183 = vmatprep.subr.mxu0 0.0
    %184 = vmatpush1.msra.mxu0 0.0
    %185 = vmatprep.subr.mxu0 0.0
    %186 = vmatpush1.msra.mxu0 0.0
    %187 = vmatprep.subr.mxu0 0.0
    %188 = vmatpush1.msra.mxu0 0.0
    %189 = vmatprep.subr.mxu0 0.0
    %190 = vmatpush1.msra.mxu0 0.0
    %191 = vmatprep.subr.mxu0 0.0
    %192 = vmatpush1.msra.mxu0 0.0
    %193 = vmatprep.subr.mxu0 0.0
    %194 = vmatpush1.msra.mxu0 %v137
    %195 = vmatprep.subr.mxu0 0.0
    %196 = vmatpush2.msra.mxu0 0.0
    %197 = vmatprep.subr.mxu0 0.0
    %198 = vmatpush2.msra.mxu0 0.0
    %199 = vmatprep.subr.mxu0 0.0
    %200 = vmatpush2.msra.mxu0 0.0
    %201 = vmatprep.subr.mxu0 0.0
    %202 = vmatpush2.msra.mxu0 0.0
    %203 = vmatprep.subr.mxu0 0.0
    %204 = vmatpush2.msra.mxu0 0.0
    %205 = vmatprep.subr.mxu0 0.0
    %206 = vmatpush2.msra.mxu0 0.0
    %207 = vmatprep.subr.mxu0 0.0
    %208 = vmatpush2.msra.mxu0 0.0
    %209 = vmatprep.subr.mxu0 0.0
    %210 = vmatpush2.msra.mxu0 0.0
    %211 = vmatprep.subr.mxu0 0.0
    %212 = vmatpush2.msra.mxu0 0.0
    %213 = vmatprep.subr.mxu0 0.0
    %214 = vmatpush2.msra.mxu0 0.0
    %215 = vmatprep.subr.mxu0 0.0
    %216 = vmatpush2.msra.mxu0 0.0
    %217 = vmatprep.subr.mxu0 0.0
    %218 = vmatpush2.msra.mxu0 0.0
    %219 = vmatprep.subr.mxu0 0.0
    %220 = vmatpush2.msra.mxu0 0.0
    %221 = vmatprep.subr.mxu0 0.0
    %222 = vmatpush2.msra.mxu0 0.0
    %223 = vmatprep.subr.mxu0 0.0
    %224 = vmatpush2.msra.mxu0 0.0
    %225 = vmatprep.subr.mxu0 0.0
    %226 = vmatpush2.msra.mxu0 0.0
    %227 = vmatprep.mubr.f32.mxu0 0.0
    %228 = vmatmul.mubr.f32.gmra.mxu0 %v158
    %v229 = vpop.f32.mrf.mxu0
    %v230 = vadd.f32 0.0, %v229
    %v231 = vpop.f32.mrf.mxu0
    %232 = vmatprep.mubr.f32.mxu0 0.0
    %233 = vmatmul.mubr.f32.gmra.mxu0 %v161
    %v234 = vpop.f32.mrf.mxu0
    %v235 = vadd.f32 0.0, %v234
    %v236 = vpop.f32.mrf.mxu0
    %237 = vdwg.mxu0
    %v238 = vld [vmem:[#allocation2] sm:$0xff]
    %v239 = vld [vmem:[#allocation2 + $0x8] sm:$0xff]
    %v240 = vmax.f32 %v238, 0.0
    %v241 = vmax.f32 %v239, 0.0
    %v242 = vsub.f32 %v230, %v240
    %v243 = vsub.f32 %v235, %v241
    %v244 = vld [vmem:[#allocation5] sm:$0xff]
    %v245 = vld [vmem:[#allocation5 + $0x8] sm:$0xff]
    %v246 = vld [vmem:[#allocation5 + $0x10] sm:$0xff]
    %v247 = vld [vmem:[#allocation5 + $0x18] sm:$0xff]
    %v248 = vld [vmem:[#allocation5 + $0x20] sm:$0xff]
    %v249 = vld [vmem:[#allocation5 + $0x28] sm:$0xff]
    %v250 = vld [vmem:[#allocation5 + $0x30] sm:$0xff]
    %v251 = vld [vmem:[#allocation5 + $0x38] sm:$0xff]
    %v252 = vld [vmem:[#allocation5 + $0x40] sm:$0xff]
    %v253 = vld [vmem:[#allocation5 + $0x48] sm:$0xff]
    %v254 = vld [vmem:[#allocation5 + $0x50] sm:$0xff]
    %v255 = vld [vmem:[#allocation5 + $0x58] sm:$0xff]
    %v256 = vld [vmem:[#allocation5 + $0x60] sm:$0xff]
    %v257 = vld [vmem:[#allocation5 + $0x68] sm:$0xff]
    %v258 = vld [vmem:[#allocation5 + $0x70] sm:$0xff]
    %v259 = vld [vmem:[#allocation5 + $0x78] sm:$0xff]
    %v260 = vld [vmem:[%s5] sm:$0x1]
    %v262 = vlaneseq
    %v263 = vshrl.u32 %v262, 7
    %v264 = vsub.s32 0, %v263
    %v265 = vrot.slane %v260, %v264
    %267 = vmatprep.subr.mxu0 0.0
    %268 = vmatpush1.msra.mxu0 %v259
    %269 = vmatprep.subr.mxu0 0.0
    %270 = vmatpush1.msra.mxu0 %v258
    %271 = vmatprep.subr.mxu0 0.0
    %272 = vmatpush1.msra.mxu0 %v257
    %273 = vmatprep.subr.mxu0 0.0
    %274 = vmatpush1.msra.mxu0 %v256
    %275 = vmatprep.subr.mxu0 0.0
    %276 = vmatpush1.msra.mxu0 %v255
    %277 = vmatprep.subr.mxu0 0.0
    %278 = vmatpush1.msra.mxu0 %v254
    %279 = vmatprep.subr.mxu0 0.0
    %280 = vmatpush1.msra.mxu0 %v253
    %281 = vmatprep.subr.mxu0 0.0
    %282 = vmatpush1.msra.mxu0 %v252
    %283 = vmatprep.subr.mxu0 0.0
    %284 = vmatpush1.msra.mxu0 %v251
    %285 = vmatprep.subr.mxu0 0.0
    %286 = vmatpush1.msra.mxu0 %v250
    %287 = vmatprep.subr.mxu0 0.0
    %288 = vmatpush1.msra.mxu0 %v249
    %289 = vmatprep.subr.mxu0 0.0
    %290 = vmatpush1.msra.mxu0 %v248
    %291 = vmatprep.subr.mxu0 0.0
    %292 = vmatpush1.msra.mxu0 %v247
    %293 = vmatprep.subr.mxu0 0.0
    %294 = vmatpush1.msra.mxu0 %v246
    %295 = vmatprep.subr.mxu0 0.0
    %296 = vmatpush1.msra.mxu0 %v245
    %297 = vmatprep.subr.mxu0 0.0
    %298 = vmatpush1.msra.mxu0 %v244
    %299 = vmatprep.subr.mxu0 0.0
    %300 = vmatpush2.msra.mxu0 0.0
    %301 = vmatprep.subr.mxu0 0.0
    %302 = vmatpush2.msra.mxu0 0.0
    %303 = vmatprep.subr.mxu0 0.0
    %304 = vmatpush2.msra.mxu0 0.0
    %305 = vmatprep.subr.mxu0 0.0
    %306 = vmatpush2.msra.mxu0 0.0
    %307 = vmatprep.subr.mxu0 0.0
    %308 = vmatpush2.msra.mxu0 0.0
    %309 = vmatprep.subr.mxu0 0.0
    %310 = vmatpush2.msra.mxu0 0.0
    %311 = vmatprep.subr.mxu0 0.0
    %312 = vmatpush2.msra.mxu0 0.0
    %313 = vmatprep.subr.mxu0 0.0
    %314 = vmatpush2.msra.mxu0 0.0
    %315 = vmatprep.subr.mxu0 0.0
    %316 = vmatpush2.msra.mxu0 0.0
    %317 = vmatprep.subr.mxu0 0.0
    %318 = vmatpush2.msra.mxu0 0.0
    %319 = vmatprep.subr.mxu0 0.0
    %320 = vmatpush2.msra.mxu0 0.0
    %321 = vmatprep.subr.mxu0 0.0
    %322 = vmatpush2.msra.mxu0 0.0
    %323 = vmatprep.subr.mxu0 0.0
    %324 = vmatpush2.msra.mxu0 0.0
    %325 = vmatprep.subr.mxu0 0.0
    %326 = vmatpush2.msra.mxu0 0.0
    %327 = vmatprep.subr.mxu0 0.0
    %328 = vmatpush2.msra.mxu0 0.0
    %329 = vmatprep.subr.mxu0 0.0
    %330 = vmatpush2.msra.mxu0 0.0
    %331 = vmatprep.mubr.f32.mxu0 0.0
    %332 = vmatmul.mubr.f32.gmra.mxu0 %v242
    %v333 = vpop.f32.mrf.mxu0
    %v334 = vadd.f32 %v265, %v333
    %v335 = vpop.f32.mrf.mxu0
    %336 = vmatprep.mubr.f32.mxu0 0.0
    %337 = vmatmul.mubr.f32.gmra.mxu0 %v243
    %v338 = vpop.f32.mrf.mxu0
    %v339 = vadd.f32 %v265, %v338
    %v340 = vpop.f32.mrf.mxu0
    %341 = vdwg.mxu0
    %342 = vst [vmem:[#allocation7] sm:$0xff] %v334
    %343 = vst [vmem:[#allocation7 + $0x8] sm:$0xff] %v339
    // Predicated region
    $region34: #{tpu_custom_call.1} parent=1 // pred_check
      _
    $region35: #{tpu_custom_call.1} parent=1 // pred_check_branch
      %345 = sbr.rel (0) target = $region37
    $region36: #{tpu_custom_call.1} parent=1 // pred_region
      %s347 = ssub.s32 256, 256
      %348 = vsyncadd [#allocation4], %s347
      %s349 = sshll.u32 [#allocation7], 4
      %s350 = int_to_ptr.vmem [resolvable:$true] %s349
      %355 = dma.vmem_to_hbm [thread:$0]  %s350, 256, %s6, [#allocation4], 128, 128, 8
    $region37: #{tpu_custom_call.1} parent=1 // pred_fallthru
      _
    // Predicated region
    $region38: #{tpu_custom_call.1} parent=1 // pred_check
      _
    $region39: #{tpu_custom_call.1} parent=1 // pred_check_branch
      %357 = sbr.rel (0) target = $region41
    $region40: #{tpu_custom_call.1} parent=1 // pred_region
      %358 = dma.done [#allocation4], 256
    $region41: #{tpu_custom_call.1} parent=1 // pred_fallthru
      _
    %359 = vsyncpa [#allocation3], 1
    %360 = vsyncpa [#allocation6], 1
    %361 = vsyncpa [#allocation4], 1

</llo_original>
